<compile_context>
chip_gen: v7x
topology: tpu7x:2x2x1
jax: 0.10.0
libtpu: 0.0.40
codegen_flags: <defaults>
</compile_context>

<pallas_src>
import jax
import jax.numpy as jnp
from jax import lax
from jax.experimental import pallas as pl
from jax.experimental.pallas import tpu as pltpu

# ----------------------------- problem sizes --------------------------------
N, CIN, H, W = 2, 4, 16, 16
COUT, KH, KW = 8, 3, 3
PAD = 1                       # 'same' padding for 3x3 / stride 1
WP = W + 2 * PAD              # padded width                      (18)
K_DIM = KH * WP * CIN         # contraction dim of the matmul     (216)
ROWS = N * H                  # rows of the 2D output slab        (32)
LANES = W * COUT              # lanes of the 2D output slab       (128) -> dense


# ------------------------------ Pallas kernel --------------------------------
def conv_relu_kernel(lhs_ref, w_ref, b_ref, o_ref):
    """Single lane-dense MXU matmul + bias + ReLU.

    lhs: (ROWS, K_DIM)  = (32, 216)   per-output-row padded input slab
    w:   (K_DIM, LANES) = (216, 128)  row-Toeplitz expanded conv weights
    b:   (1, LANES)     = (1, 128)    bias tiled across W
    o:   (ROWS, LANES)  = (32, 128)   o[n*H+h, w*COUT+c] = y[n,h,w,c]
    """
    acc = jnp.dot(lhs_ref[...], w_ref[...], preferred_element_type=jnp.float32)
    acc = acc + b_ref[...]
    o_ref[...] = jnp.maximum(acc, 0.0).astype(o_ref.dtype)


def conv_relu_pallas(lhs, big_w, bias_row):
    # Whole arrays (~155 KB total) live in VMEM; one kernel invocation, no grid.
    # TODO(synk): at real batch/H/W, grid over row tiles of the (ROWS, LANES)
    # slab with dimension_semantics=("parallel",) so v7x's two TensorCores
    # both get work, and budget tiles against 64 MiB VMEM on v7x.
    return pl.pallas_call(
        conv_relu_kernel,
        out_shape=jax.ShapeDtypeStruct((ROWS, LANES), jnp.float32),
        in_specs=[
            pl.BlockSpec(memory_space=pltpu.MemorySpace.VMEM),
            pl.BlockSpec(memory_space=pltpu.MemorySpace.VMEM),
            pl.BlockSpec(memory_space=pltpu.MemorySpace.VMEM),
        ],
        out_specs=pl.BlockSpec(memory_space=pltpu.MemorySpace.VMEM),
    )(lhs, big_w, bias_row)


# --------------------------- layout / param prep -----------------------------
def build_row_toeplitz_weight(w_hwio):
    """Expand conv weights (KH, KW, CIN, COUT) to the (K_DIM, LANES) matrix
    BigW[(kh*WP + wp)*CIN + ci, w*COUT + c] = w_hwio[kh, wp - w, ci, c]
    (zero when wp - w is outside [0, KW)).  One-time parameter transform."""
    wp = jnp.arange(WP)[:, None]                    # (WP, 1)
    wo = jnp.arange(W)[None, :]                     # (1, W)
    kw = wp - wo                                    # (WP, W)
    valid = (kw >= 0) & (kw < KW)
    kw_c = jnp.clip(kw, 0, KW - 1)
    g = w_hwio[:, kw_c]                             # (KH, WP, W, CIN, COUT)
    g = jnp.where(valid[None, :, :, None, None], g, 0.0)
    return jnp.transpose(g, (0, 1, 3, 2, 4)).reshape(K_DIM, LANES)


def im2row(x_nchw):
    """NCHW -> per-output-row slab (ROWS, K_DIM); XLA fuses transpose/pad/stack
    so the tiny tensor makes a single trip to the kernel input layout."""
    x_nhwc = jnp.transpose(x_nchw, (0, 2, 3, 1))                        # (N,H,W,CIN)
    x_pad = jnp.pad(x_nhwc, ((0, 0), (PAD, PAD), (PAD, PAD), (0, 0)))   # (N,H+2,WP,CIN)
    rows = jnp.stack([x_pad[:, kh:kh + H] for kh in range(KH)], axis=2)  # (N,H,KH,WP,CIN)
    return rows.reshape(ROWS, K_DIM)


def _forward(x_nchw, big_w, bias_row):
    lhs = im2row(x_nchw)
    y2d = conv_relu_pallas(lhs, big_w, bias_row)     # (32, 128), lane-dense
    y_nhwc = y2d.reshape(N, H, W, COUT)
    return jnp.transpose(y_nhwc, (0, 3, 1, 2))       # back to NCHW (PyTorch conv)


# ------------------------- DistModule-equivalent wrapper ---------------------
def broadcast_params(params):
    """dist.broadcast(p, 0) for each parameter.  Identity at world_size == 1."""
    # TODO(synk): multi-host parameter broadcast would use
    # pltpu.make_async_remote_copy + barrier semaphores.
    return params


class DistModuleJax:
    """Mirrors DistModule: forward(*inputs) delegates to the wrapped module
    (Conv2d(4->8, 3x3, pad=1) + bias + ReLU).  Gradient all-reduce hooks are
    backward-only and have no forward-pass effect."""

    def __init__(self, params, sync=False):
        params = broadcast_params(params)
        # One-time parameter prep (conceptually done at init, like broadcast):
        self.big_w = build_row_toeplitz_weight(params["weight_hwio"])
        self.bias_row = jnp.tile(params["bias"].reshape(COUT), (W,)).reshape(1, LANES)
        self._fwd = jax.jit(lambda x: _forward(x, self.big_w, self.bias_row))

    def __call__(self, x_nchw):
        return self._fwd(x_nchw)


# ------------------------------------ main -----------------------------------
if __name__ == "__main__":
    key = jax.random.PRNGKey(0)
    kx, kw, kb = jax.random.split(key, 3)

    x = jax.random.normal(kx, (N, CIN, H, W), dtype=jnp.float32)  # NCHW input

    fan_in = CIN * KH * KW
    w_oihw = jax.random.normal(kw, (COUT, CIN, KH, KW),
                               dtype=jnp.float32) * (1.0 / fan_in) ** 0.5
    b = jax.random.normal(kb, (COUT,), dtype=jnp.float32) * 0.01

    params = {
        "weight_hwio": jnp.transpose(w_oihw, (2, 3, 1, 0)),  # OIHW -> HWIO
        "bias": b,
    }

    model = DistModuleJax(params, sync=False)
    y = model(x)
    y = jax.block_until_ready(y)

    # Reference check against XLA conv (same semantics as torch Conv2d + ReLU).
    y_ref = lax.conv_general_dilated(
        x, w_oihw, window_strides=(1, 1), padding=((PAD, PAD), (PAD, PAD)),
        dimension_numbers=("NCHW", "OIHW", "NCHW"))
    y_ref = jnp.maximum(y_ref + b.reshape(1, COUT, 1, 1), 0.0)

    assert y.shape == (N, COUT, H, W)
    assert jnp.allclose(y, y_ref, atol=1e-4, rtol=1e-4)

    print("KERNEL_OK")
</pallas_src>

<mosaic_0001>
module attributes {stable_mosaic.version = 11 : i64} {
  func.func @conv_relu_kernel(%arg0: memref<32x216xf32, #tpu.memory_space<vmem>>, %arg1: memref<216x128xf32, #tpu.memory_space<vmem>>, %arg2: memref<1x128xf32, #tpu.memory_space<vmem>>, %arg3: memref<32x128xf32, #tpu.memory_space<vmem>>) attributes {dimension_semantics = [], scalar_prefetch = 0 : i64, scratch_operands = 0 : i64, tpu.core_type = #tpu.core_type<tc>} {
    %c0 = arith.constant 0 : index
    %c0_0 = arith.constant 0 : index
    %0 = vector.load %arg0[%c0, %c0_0] : memref<32x216xf32, #tpu.memory_space<vmem>>, vector<32x216xf32>
    %c0_1 = arith.constant 0 : index
    %c0_2 = arith.constant 0 : index
    %1 = vector.load %arg1[%c0_1, %c0_2] : memref<216x128xf32, #tpu.memory_space<vmem>>, vector<216x128xf32>
    %cst = arith.constant dense<0.000000e+00> : vector<32x128xf32>
    %2 = tpu.matmul %0, %1, %cst {dimension_numbers = #tpu.dot_dimension_numbers<[1], [0], [0], [1], [0, 0, 1, 1], [], []>} : vector<32x216xf32>, vector<216x128xf32>, vector<32x128xf32> -> vector<32x128xf32>
    %c0_3 = arith.constant 0 : index
    %c0_4 = arith.constant 0 : index
    %3 = vector.load %arg2[%c0_3, %c0_4] : memref<1x128xf32, #tpu.memory_space<vmem>>, vector<1x128xf32>
    %4 = vector.broadcast %3 : vector<1x128xf32> to vector<32x128xf32>
    %5 = arith.addf %2, %4 : vector<32x128xf32>
    %cst_5 = arith.constant 0.000000e+00 : f32
    %6 = vector.broadcast %cst_5 : f32 to vector<32x128xf32>
    %7 = arith.maximumf %5, %6 : vector<32x128xf32>
    %c0_6 = arith.constant 0 : index
    %c0_7 = arith.constant 0 : index
    %8 = vector.load %arg3[%c0_6, %c0_7] : memref<32x128xf32, #tpu.memory_space<vmem>>, vector<32x128xf32>
    tpu.vector_store %arg3[%c0_6, %c0_7], %7 {strides = array<i32>} : memref<32x128xf32, #tpu.memory_space<vmem>>, vector<32x128xf32>,
    return
  }
}

</mosaic_0001>

<llo_original>
// kernel: _lambda_.1
$region0: #{_lambda_.1}
  #allocation0 [shape = 'u32[]', space=smem, size = 0x4, offset = 0x4, fixed_abs, tag = 'smem constant byte address 0x4 - core index']
  #allocation1 [shape = 'u32[144,128]{1,0:T(1,128)}', space=vmem, size = 0x12000, scoped, tag = 'internal scratch']
  %s0 = inlined_call_operand.vmem [shape: f32[32,216], index: 0, kind: input, shape index: {}]
  %s1 = inlined_call_operand.vmem [shape: f32[216,128], index: 1, kind: input, shape index: {}]
  %s2 = inlined_call_operand.vmem [shape: f32[1,128], index: 2, kind: input, shape index: {}]
  %s3 = inlined_call_operand.vmem [shape: f32[32,128], index: 3, kind: output, shape index: {}]
  %s4 = sld [smem:[#allocation0]]
  $region22: #{_lambda_.1} parent=0
    _
  %s6 = ssub.s32 1, %s4
  %s7 = scalar_select 0, %s6, %s4
  // Predicated region
  $region2: #{_lambda_.1} parent=0 // pred_check
    _
  $region3: #{_lambda_.1} parent=0 // pred_check_branch
    %9 = sbr.rel (0) target = $region5
  $region4: #{_lambda_.1} parent=0 // pred_region
    _
  $region5: #{_lambda_.1} parent=0 // pred_fallthru
    _
  // Predicated region
  $region6: #{_lambda_.1} parent=0 // pred_check
    _
  $region7: #{_lambda_.1} parent=0 // pred_check_branch
    %11 = sbr.rel (0) target = $region9
  $region8: #{_lambda_.1} parent=0 // pred_region
    _
  $region9: #{_lambda_.1} parent=0 // pred_fallthru
    _
  // Predicated region
  $region10: #{_lambda_.1} parent=0 // pred_check
    _
  $region11: #{_lambda_.1} parent=0 // pred_check_branch
    %13 = sbr.rel (0) target = $region13
  $region12: #{_lambda_.1} parent=0 // pred_region
    _
  $region13: #{_lambda_.1} parent=0 // pred_fallthru
    _
  %v14 = vld [vmem:[%s0] sm:$0xff]
  %v15 = vld [vmem:[%s0 + $0x8] sm:$0xff]
  %v16 = vld [vmem:[%s0 + $0x10] sm:$0xff]
  %v17 = vld [vmem:[%s0 + $0x18] sm:$0xff]
  %v18 = vld [vmem:[%s0 + $0x20] sm:$0xff]
  %v19 = vld [vmem:[%s0 + $0x28] sm:$0xff]
  %v20 = vld [vmem:[%s0 + $0x30] sm:$0xff]
  %v21 = vld [vmem:[%s0 + $0x38] sm:$0xff]
  %v22 = vld [vmem:[%s1] sm:$0xff]
  %v23 = vld [vmem:[%s1 + $0x8] sm:$0xff]
  %v24 = vld [vmem:[%s1 + $0x10] sm:$0xff]
  %v25 = vld [vmem:[%s1 + $0x18] sm:$0xff]
  %v26 = vld [vmem:[%s1 + $0x20] sm:$0xff]
  %v27 = vld [vmem:[%s1 + $0x28] sm:$0xff]
  %v28 = vld [vmem:[%s1 + $0x30] sm:$0xff]
  %v29 = vld [vmem:[%s1 + $0x38] sm:$0xff]
  %v30 = vld [vmem:[%s1 + $0x40] sm:$0xff]
  %v31 = vld [vmem:[%s1 + $0x48] sm:$0xff]
  %v32 = vld [vmem:[%s1 + $0x50] sm:$0xff]
  %v33 = vld [vmem:[%s1 + $0x58] sm:$0xff]
  %v34 = vld [vmem:[%s1 + $0x60] sm:$0xff]
  %v35 = vld [vmem:[%s1 + $0x68] sm:$0xff]
  %v36 = vld [vmem:[%s1 + $0x70] sm:$0xff]
  %v37 = vld [vmem:[%s1 + $0x78] sm:$0xff]
  %v38 = vld [vmem:[%s1 + $0x80] sm:$0xff]
  %v39 = vld [vmem:[%s1 + $0x88] sm:$0xff]
  %v40 = vld [vmem:[%s1 + $0x90] sm:$0xff]
  %v41 = vld [vmem:[%s1 + $0x98] sm:$0xff]
  %v42 = vld [vmem:[%s1 + $0xa0] sm:$0xff]
  %v43 = vld [vmem:[%s1 + $0xa8] sm:$0xff]
  %v44 = vld [vmem:[%s1 + $0xb0] sm:$0xff]
  %v45 = vld [vmem:[%s1 + $0xb8] sm:$0xff]
  %v46 = vld [vmem:[%s1 + $0xc0] sm:$0xff]
  %v47 = vld [vmem:[%s1 + $0xc8] sm:$0xff]
  %v48 = vld [vmem:[%s1 + $0xd0] sm:$0xff]
  %v49 = vld [vmem:[%s2] sm:$0x1]
  %v51 = vlaneseq
  %v52 = vshrl.u32 %v51, 7
  %v53 = vsub.s32 0, %v52
  %v54 = vrot.slane %v49, %v53
  %vm56 = vcmask 719872
  %v58 = vsel %vm56, %v15, 0
  %v61 = vsel %vm56, %v17, 0
  %v64 = vsel %vm56, %v19, 0
  %v67 = vsel %vm56, %v21, 0
  %69 = vmatprep.subr.mxu0 0.0
  %70 = vmatpush1.msra.mxu0 %v22
  %71 = vmatprep.subr.mxu0 0.0
  %72 = vmatpush1.msra.mxu0 %v23
  %73 = vmatprep.subr.mxu0 0.0
  %74 = vmatpush1.msra.mxu0 %v24
  %75 = vmatprep.subr.mxu0 0.0
  %76 = vmatpush1.msra.mxu0 %v25
  %77 = vmatprep.subr.mxu0 0.0
  %78 = vmatpush1.msra.mxu0 %v26
  %79 = vmatprep.subr.mxu0 0.0
  %80 = vmatpush1.msra.mxu0 %v27
  %81 = vmatprep.subr.mxu0 0.0
  %82 = vmatpush1.msra.mxu0 %v28
  %83 = vmatprep.subr.mxu0 0.0
  %84 = vmatpush1.msra.mxu0 %v29
  %85 = vmatprep.subr.mxu0 0.0
  %86 = vmatpush1.msra.mxu0 %v30
  %87 = vmatprep.subr.mxu0 0.0
  %88 = vmatpush1.msra.mxu0 %v31
  %89 = vmatprep.subr.mxu0 0.0
  %90 = vmatpush1.msra.mxu0 %v32
  %91 = vmatprep.subr.mxu0 0.0
  %92 = vmatpush1.msra.mxu0 %v33
  %93 = vmatprep.subr.mxu0 0.0
  %94 = vmatpush1.msra.mxu0 %v34
  %95 = vmatprep.subr.mxu0 0.0
  %96 = vmatpush1.msra.mxu0 %v35
  %97 = vmatprep.subr.mxu0 0.0
  %98 = vmatpush1.msra.mxu0 %v36
  %99 = vmatprep.subr.mxu0 0.0
  %100 = vmatpush1.msra.mxu0 %v37
  %101 = vmatprep.subr.mxu0 0.0
  %102 = vmatpush1.msra.mxu0 %v38
  %103 = vmatprep.subr.mxu0 0.0
  %104 = vmatpush1.msra.mxu0 %v39
  %105 = vmatprep.subr.mxu0 0.0
  %106 = vmatpush1.msra.mxu0 %v40
  %107 = vmatprep.subr.mxu0 0.0
  %108 = vmatpush1.msra.mxu0 %v41
  %109 = vmatprep.subr.mxu0 0.0
  %110 = vmatpush1.msra.mxu0 %v42
  %111 = vmatprep.subr.mxu0 0.0
  %112 = vmatpush1.msra.mxu0 %v43
  %113 = vmatprep.subr.mxu0 0.0
  %114 = vmatpush1.msra.mxu0 %v44
  %115 = vmatprep.subr.mxu0 0.0
  %116 = vmatpush1.msra.mxu0 %v45
  %117 = vmatprep.subr.mxu0 0.0
  %118 = vmatpush1.msra.mxu0 %v46
  %119 = vmatprep.subr.mxu0 0.0
  %120 = vmatpush1.msra.mxu0 %v47
  %121 = vmatprep.subr.mxu0 0.0
  %122 = vmatpush1.msra.mxu0 %v48
  %123 = vmatprep.subr.mxu0 0.0
  %124 = vmatpush1.msra.mxu0 0.0
  %125 = vmatprep.subr.mxu0 0.0
  %126 = vmatpush1.msra.mxu0 0.0
  %127 = vmatprep.subr.mxu0 0.0
  %128 = vmatpush1.msra.mxu0 0.0
  %129 = vmatprep.subr.mxu0 0.0
  %130 = vmatpush1.msra.mxu0 0.0
  %131 = vmatprep.subr.mxu0 0.0
  %132 = vmatpush1.msra.mxu0 0.0
  %133 = vmatprep.mubr.f32.mxu0 %v58
  %134 = vmatmul.mubr.f32.gmra.mrb[0].mxu0 %v14
  %v135 = vpop.f32.mrb[0].mxu0
  %v136 = vadd.f32 %v54, %v135
  %v137 = vpop.f32.mrb[0].mxu0
  %138 = vmatprep.mubr.f32.mxu0 %v61
  %139 = vmatmul.mubr.f32.gmra.mrb[0].mxu0 %v16
  %v140 = vpop.f32.mrb[0].mxu0
  %v141 = vadd.f32 %v54, %v140
  %v142 = vpop.f32.mrb[0].mxu0
  %143 = vmatprep.mubr.f32.mxu0 %v64
  %144 = vmatmul.mubr.f32.gmra.mrb[0].mxu0 %v18
  %v145 = vpop.f32.mrb[0].mxu0
  %v146 = vadd.f32 %v54, %v145
  %v147 = vpop.f32.mrb[0].mxu0
  %148 = vmatprep.mubr.f32.mxu0 %v67
  %149 = vmatmul.mubr.f32.gmra.mrb[0].mxu0 %v20
  %v150 = vpop.f32.mrb[0].mxu0
  %v151 = vadd.f32 %v54, %v150
  %v152 = vpop.f32.mrb[0].mxu0
  %153 = vdwg.mxu0
  %v154 = vmax.f32 %v136, 0.0
  %v155 = vmax.f32 %v141, 0.0
  %v156 = vmax.f32 %v146, 0.0
  %v157 = vmax.f32 %v151, 0.0
  %158 = vst [vmem:[%s3] sm:$0xff] %v154
  %159 = vst [vmem:[%s3 + $0x8] sm:$0xff] %v155
  %160 = vst [vmem:[%s3 + $0x10] sm:$0xff] %v156
  %161 = vst [vmem:[%s3 + $0x18] sm:$0xff] %v157
  // Predicated region
  $region14: #{_lambda_.1} parent=0 // pred_check
    _
  $region15: #{_lambda_.1} parent=0 // pred_check_branch
    %163 = sbr.rel (0) target = $region17
  $region16: #{_lambda_.1} parent=0 // pred_region
    _
  $region17: #{_lambda_.1} parent=0 // pred_fallthru
    _
  // Predicated region
  $region18: #{_lambda_.1} parent=0 // pred_check
    _
  $region19: #{_lambda_.1} parent=0 // pred_check_branch
    %165 = sbr.rel (0) target = $region21
  $region20: #{_lambda_.1} parent=0 // pred_region
    _
  $region21: #{_lambda_.1} parent=0 // pred_fallthru
    _

</llo_original>
